<compile_context>
chip_gen: v7x
topology: tpu7x:2x2x1
jax: 0.10.0
libtpu: 0.0.40
codegen_flags: <defaults>
</compile_context>

<pallas_src>
import math

import jax
import jax.numpy as jnp
from jax import lax
from jax.experimental import pallas as pl
from jax.experimental.pallas import tpu as pltpu


# ==========================================================================
# Kernel helpers
# ==========================================================================
def _sigmoid(x):
    # sigmoid(x) == 0.5 * (tanh(x / 2) + 1): one EUP transcendental per element
    # (cheaper than exp + divide on the serial recurrence path).
    return 0.5 * jnp.tanh(0.5 * x) + 0.5


def _mlp_heads(sa_ref, w1_ref, w23_ref, mlp_b_ref, q_ref):
    """Both Q-head MLPs packed side by side [head1 | head2]; writes (B, 2)."""
    F2 = w23_ref.shape[0]                               # 2F = 256
    w1 = w1_ref[...].astype(jnp.float32)                # (n_in, 2F)
    w2 = w23_ref[:, 0:F2].astype(jnp.float32)           # (2F, 2F) block-diag
    w3 = w23_ref[:, F2:F2 + 2].astype(jnp.float32)      # (2F, 2)  block-diag
    b1 = mlp_b_ref[:, 0:F2]
    b2 = mlp_b_ref[:, F2:2 * F2]
    b3 = mlp_b_ref[:, 2 * F2:2 * F2 + 2]
    h1 = jnp.maximum(
        jnp.dot(sa_ref[...], w1, preferred_element_type=jnp.float32) + b1, 0.0)
    h2 = jnp.maximum(
        jnp.dot(h1, w2, preferred_element_type=jnp.float32) + b2, 0.0)
    # q = tanh(l3(cat([scored_x1, x2], 1)))[:, -1, :] keeps only the x2 row,
    # so q is computed directly from x2.
    q_ref[...] = jnp.tanh(
        jnp.dot(h2, w3, preferred_element_type=jnp.float32) + b3)


# ==========================================================================
# Fast path: q1/q2 only (what Critic.forward returns)
# ==========================================================================
def critic_q_kernel(sa_ref, w1_ref, w23_ref, mlp_b_ref, q_ref):
    _mlp_heads(sa_ref, w1_ref, w23_ref, mlp_b_ref, q_ref)


# ==========================================================================
# Full path: bidirectional LSTM + shared attention + scored_x1 + both heads
# ==========================================================================
def critic_full_kernel(x_ref, sa_ref, lstm_w_ref, la_w_ref, w1_ref, w23_ref,
                       mlp_b_ref, rnn_b_ref,
                       q_ref, scored_ref,
                       xg_ref, hh_ref, x1_ref):
    # x_ref:      (T*B, 2I)  schedule-order inputs, row t*B+b = [x[t,b] | x[T-1-t,b]]
    # lstm_w_ref: (2I+2H, 8H) bf16 [wih_sched ; whh_blk], gate columns
    #             [i_f i_b | f_f f_b | o_f o_b | g_f g_b]
    # la_w_ref:   (2H, 2H) bf16 (pre-transposed la weight)
    # w1_ref:     (n_in, 2F) bf16;  w23_ref: (2F, 2F+2) bf16 [l2_blk | l3_blk]
    # mlp_b_ref:  (1, 2F+2F+2) f32; rnn_b_ref: (1, 8H+2H) f32 [gate bias | la bias]
    # q_ref:      (B, 2)  [q1 | q2];  scored_ref: (T, B, 2H)
    # xg_ref:     (T*B, 8H) scratch (schedule-order input projections)
    # hh_ref:     (T*B, 2H) scratch (schedule-order h history)
    # x1_ref:     (T, B, 2H) scratch (time-ordered bidirectional output)
    TB, I2 = x_ref.shape
    G = xg_ref.shape[1]                      # 8H
    H2 = hh_ref.shape[1]                     # 2H
    H = H2 // 2
    T, B, _ = x1_ref.shape

    b_gate = rnn_b_ref[:, 0:G]               # (1, 8H)
    la_b = rnn_b_ref[:, G:G + H2]            # (1, 2H)

    wih = lstm_w_ref[0:I2, :].astype(jnp.float32)        # (2I, 8H)
    whh = lstm_w_ref[I2:I2 + H2, :].astype(jnp.float32)  # (2H, 8H), loop-invariant

    # ---- hoisted, schedule-order input projection (no per-step select) ----
    xg_ref[...] = (jnp.dot(x_ref[...], wih,
                           preferred_element_type=jnp.float32) + b_gate)

    # ---- fused fwd+bwd recurrence (serial critical path) ----
    h = jnp.zeros((B, H2), jnp.float32)      # [h_fwd | h_bwd]
    c = jnp.zeros((B, H2), jnp.float32)
    for s in range(T):                       # static unroll, static slice indices
        gates = xg_ref[s * B:(s + 1) * B, :] + jnp.dot(
            h, whh, preferred_element_type=jnp.float32)
        i_g = _sigmoid(gates[:, 0:H2])                   # [i_f | i_b]
        f_g = _sigmoid(gates[:, H2:2 * H2])              # [f_f | f_b]
        o_g = _sigmoid(gates[:, 2 * H2:3 * H2])          # [o_f | o_b]
        g_g = jnp.tanh(gates[:, 3 * H2:4 * H2])          # [g_f | g_b]
        c = f_g * c + i_g * g_g
        h = o_g * jnp.tanh(c)
        hh_ref[s * B:(s + 1) * B, :] = h                 # one full-lane store
    htc = h    # == cat(ht[0], ht[1]): fwd final (t=T-1) | bwd final (t=0)

    # ---- de-interleave schedule order -> time order (off the critical path) ----
    for t in range(T):
        x1_ref[t, :, 0:H] = hh_ref[t * B:(t + 1) * B, 0:H]          # fwd @ time t
        x1_ref[t, :, H:H2] = hh_ref[(T - 1 - t) * B:(T - t) * B, H:H2]  # bwd @ time t

    # ---- shared attention (lstm_1 is lstm_2, la_1 is la_2): computed ONCE ----
    la_w = la_w_ref[...].astype(jnp.float32)
    x1 = x1_ref[...]                                     # (T, B, 2H)
    u = jnp.tanh(
        jnp.dot(x1.reshape(TB, H2), la_w,
                preferred_element_type=jnp.float32) + la_b
    ).reshape(T, B, H2)
    # NOTE: the PyTorch module scales by 1/sqrt(u.shape[0]) with batch-first u,
    # i.e. 1/sqrt(batch); reproduced faithfully.
    att = jnp.sum(u * htc[None, :, :], axis=-1, keepdims=True) * (1.0 / math.sqrt(B))
    att = att - jnp.max(att, axis=0, keepdims=True)      # softmax over time (axis 0)
    e = jnp.exp(att)
    att_score = e * pl.reciprocal(jnp.sum(e, axis=0, keepdims=True), approx=True)
    scored_ref[...] = x1 * att_score

    # ---- both Q-head MLPs ----
    _mlp_heads(sa_ref, w1_ref, w23_ref, mlp_b_ref, q_ref)


# ==========================================================================
# Wrappers
# ==========================================================================
def _critic_pallas_q(params, state, action):
    sa = jnp.concatenate([state, action], axis=1)
    B = sa.shape[0]
    vmem = pl.BlockSpec(memory_space=pltpu.MemorySpace.VMEM)
    q = pl.pallas_call(
        critic_q_kernel,
        out_shape=jax.ShapeDtypeStruct((B, 2), jnp.float32),
        in_specs=[vmem] * 4,
        out_specs=vmem,
    )(sa, params["w1"], params["w23"], params["mlp_b"])
    return q[:, 0:1], q[:, 1:2]


def _critic_pallas_full(params, history, state, action):
    B, T, I = history.shape
    H2 = params["la_w"].shape[0]                     # 2H = 128
    H = H2 // 2
    sa = jnp.concatenate([state, action], axis=1)
    hist_tm = jnp.transpose(history, (1, 0, 2))      # (T, B, I) time-major
    # schedule layout: row (t*B + b) = [x[t, b] | x[T-1-t, b]]  (free in HBM/XLA)
    x_sched = jnp.concatenate([hist_tm, hist_tm[::-1]], axis=-1).reshape(T * B, 2 * I)
    vmem = pl.BlockSpec(memory_space=pltpu.MemorySpace.VMEM)
    q, scored_tm = pl.pallas_call(
        critic_full_kernel,
        out_shape=(jax.ShapeDtypeStruct((B, 2), jnp.float32),
                   jax.ShapeDtypeStruct((T, B, H2), jnp.float32)),
        in_specs=[vmem] * 8,
        out_specs=(vmem, vmem),
        scratch_shapes=[pltpu.VMEM((T * B, 8 * H), jnp.float32),
                        pltpu.VMEM((T * B, H2), jnp.float32),
                        pltpu.VMEM((T, B, H2), jnp.float32)],
    )(x_sched, sa, params["lstm_w"], params["la_w"],
      params["w1"], params["w23"], params["mlp_b"], params["rnn_b"])
    scored = jnp.transpose(scored_tm, (1, 0, 2))     # (B, T, 2H) batch-major
    return q[:, 0:1], q[:, 1:2], scored


def critic_forward(params, history, state, action):
    # Matches Critic.forward's observable outputs (q1, q2).  The LSTM/attention
    # branch cannot influence them (the [:, -1, :] index keeps only the x2 row),
    # so the fast path skips that dead work entirely.
    del history
    return _critic_pallas_q(params, state, action)


# ==========================================================================
# Parameter init (PyTorch layout) + one-time repack into kernel layout
# ==========================================================================
def _gate_blocks(w, H):
    """Split a (..., 4H) PyTorch-gate-ordered [i, f, g, o] array into (i, f, o, g)."""
    return w[..., 0:H], w[..., H:2 * H], w[..., 3 * H:4 * H], w[..., 2 * H:3 * H]


def pack_params(raw, n_states, n_actions, H, F):
    """Repack raw (PyTorch-layout) weights into kernel layout ONCE at init."""
    wdt = jnp.bfloat16
    I = n_states

    # LSTM input-hidden in schedule layout: rows [x_fwd_input ; x_bwd_input],
    # gate columns [i_f i_b f_f f_b o_f o_b g_f g_b].
    i_f, f_f, o_f, g_f = _gate_blocks(raw["wih_f"].T, H)
    i_b, f_b, o_b, g_b = _gate_blocks(raw["wih_b"].T, H)
    zI = jnp.zeros((I, H), jnp.float32)
    wih_sched = jnp.concatenate([
        jnp.concatenate([i_f, zI, f_f, zI, o_f, zI, g_f, zI], axis=1),
        jnp.concatenate([zI, i_b, zI, f_b, zI, o_b, zI, g_b], axis=1)], axis=0)

    # Recurrent: block-diagonal over [h_f | h_b] rows, same gate-column order.
    hi_f, hf_f, ho_f, hg_f = _gate_blocks(raw["whh_f"].T, H)
    hi_b, hf_b, ho_b, hg_b = _gate_blocks(raw["whh_b"].T, H)
    zH = jnp.zeros((H, H), jnp.float32)
    whh_blk = jnp.concatenate([
        jnp.concatenate([hi_f, zH, hf_f, zH, ho_f, zH, hg_f, zH], axis=1),
        jnp.concatenate([zH, hi_b, zH, hf_b, zH, ho_b, zH, hg_b], axis=1)], axis=0)
    lstm_w = jnp.concatenate([wih_sched, whh_blk], axis=0).astype(wdt)   # (2I+2H, 8H)

    bi_f, bf_f, bo_f, bg_f = _gate_blocks(raw["b_f"][None, :], H)
    bi_b, bf_b, bo_b, bg_b = _gate_blocks(raw["b_b"][None, :], H)
    b_gate = jnp.concatenate([bi_f, bi_b, bf_f, bf_b, bo_f, bo_b, bg_f, bg_b], axis=1)
    rnn_b = jnp.concatenate([b_gate, raw["la_b"][None, :]], axis=1)      # (1, 8H+2H)

    # MLP heads packed side by side [head1 | head2]; l2/l3 block-diagonal.
    w1 = jnp.concatenate([raw["l1_w_1"].T, raw["l1_w_2"].T], axis=1).astype(wdt)
    zF = jnp.zeros((F, F), jnp.float32)
    w2_blk = jnp.concatenate([
        jnp.concatenate([raw["l2_w_1"].T, zF], axis=1),
        jnp.concatenate([zF, raw["l2_w_2"].T], axis=1)], axis=0)
    zF1 = jnp.zeros((F, 1), jnp.float32)
    w3_blk = jnp.concatenate([
        jnp.concatenate([raw["l3_w_1"].T, zF1], axis=1),
        jnp.concatenate([zF1, raw["l3_w_2"].T], axis=1)], axis=0)
    w23 = jnp.concatenate([w2_blk, w3_blk], axis=1).astype(wdt)          # (2F, 2F+2)
    mlp_b = jnp.concatenate([raw["l1_b_1"], raw["l1_b_2"],
                             raw["l2_b_1"], raw["l2_b_2"],
                             raw["l3_b_1"], raw["l3_b_2"]])[None, :]     # (1, 2F+2F+2)
    return {"lstm_w": lstm_w, "la_w": raw["la_w"].T.astype(wdt),
            "w1": w1, "w23": w23, "mlp_b": mlp_b, "rnn_b": rnn_b}


def init_params(key, n_states, n_actions, hidden=64, feat=128, init_w=0.003):
    """Deterministic synthetic weights (PyTorch layout) + packed kernel layout."""
    H, F = hidden, feat
    keys = jax.random.split(key, 22)

    def uni(k, shape, bound):
        return jax.random.uniform(k, shape, jnp.float32, -bound, bound)

    s_l = 1.0 / math.sqrt(H)
    n_in = n_states + n_actions
    raw = {
        "wih_f": uni(keys[0], (4 * H, n_states), s_l),
        "whh_f": uni(keys[1], (4 * H, H), s_l),
        "b_f":   uni(keys[2], (4 * H,), s_l) + uni(keys[3], (4 * H,), s_l),  # b_ih+b_hh
        "wih_b": uni(keys[4], (4 * H, n_states), s_l),
        "whh_b": uni(keys[5], (4 * H, H), s_l),
        "b_b":   uni(keys[6], (4 * H,), s_l) + uni(keys[7], (4 * H,), s_l),
        "la_w":  uni(keys[8], (F, F), 1.0 / math.sqrt(F)),
        "la_b":  uni(keys[9], (F,), 1.0 / math.sqrt(F)),
    }
    off = 10
    for h in ("1", "2"):
        raw[f"l1_w_{h}"] = uni(keys[off + 0], (F, n_in), 1.0 / math.sqrt(n_in))
        raw[f"l1_b_{h}"] = uni(keys[off + 1], (F,), 1.0 / math.sqrt(n_in))
        raw[f"l2_w_{h}"] = uni(keys[off + 2], (F, F), 1.0 / math.sqrt(F))
        raw[f"l2_b_{h}"] = uni(keys[off + 3], (F,), 1.0 / math.sqrt(F))
        raw[f"l3_w_{h}"] = uni(keys[off + 4], (1, F), init_w)
        raw[f"l3_b_{h}"] = uni(keys[off + 5], (1,), init_w)
        off += 6
    # Snap every parameter to the bf16 grid so the bf16-packed kernel weights
    # and the f32 reference use identical values.
    raw = {k: v.astype(jnp.bfloat16).astype(jnp.float32) for k, v in raw.items()}
    return raw, pack_params(raw, n_states, n_actions, H, F)


# ==========================================================================
# Pure-JAX (non-Pallas) reference mirroring the PyTorch forward
# ==========================================================================
def critic_reference(raw, history, state, action):
    B, T, _ = history.shape
    H = raw["whh_f"].shape[1]

    def run_dir(wih, whh, b, reverse):
        def cell(carry, x_t):
            h, c = carry
            g = x_t @ wih.T + h @ whh.T + b
            i = jax.nn.sigmoid(g[:, 0:H])
            f = jax.nn.sigmoid(g[:, H:2 * H])
            gg = jnp.tanh(g[:, 2 * H:3 * H])
            o = jax.nn.sigmoid(g[:, 3 * H:4 * H])
            c = f * c + i * gg
            h = o * jnp.tanh(c)
            return (h, c), h
        x_tm = jnp.transpose(history, (1, 0, 2))
        init = (jnp.zeros((B, H), jnp.float32), jnp.zeros((B, H), jnp.float32))
        (h_fin, _), hs = lax.scan(cell, init, x_tm, reverse=reverse)
        return jnp.transpose(hs, (1, 0, 2)), h_fin           # (B,T,H), (B,H)

    out_f, ht_f = run_dir(raw["wih_f"], raw["whh_f"], raw["b_f"], False)
    out_b, ht_b = run_dir(raw["wih_b"], raw["whh_b"], raw["b_b"], True)
    x1 = jnp.concatenate([out_f, out_b], axis=-1)            # (B, T, 2H)
    htc = jnp.concatenate([ht_f, ht_b], axis=-1)             # (B, 2H)

    u = jnp.tanh(x1 @ raw["la_w"].T + raw["la_b"])
    att = jnp.einsum("btd,bd->bt", u, htc)[..., None] / math.sqrt(B)
    att_score = jax.nn.softmax(att, axis=1)
    scored = x1 * att_score

    sa = jnp.concatenate([state, action], axis=1)

    def head(i):
        h1 = jax.nn.relu(sa @ raw[f"l1_w_{i}"].T + raw[f"l1_b_{i}"])
        h2 = jax.nn.relu(h1 @ raw[f"l2_w_{i}"].T + raw[f"l2_b_{i}"])
        # last row of cat([scored_x1, x2], 1) is x2 -> q = tanh(l3(x2))
        return jnp.tanh(h2 @ raw[f"l3_w_{i}"].T + raw[f"l3_b_{i}"])

    return head(1), head(2), scored


if __name__ == "__main__":
    B, T = 2, 8
    n_states, n_actions = 16, 4

    root = jax.random.PRNGKey(0)
    k_p, k_h, k_s, k_a = jax.random.split(root, 4)

    raw, packed = init_params(k_p, n_states, n_actions)
    history = jax.random.normal(k_h, (B, T, n_states), jnp.float32)
    state = jax.random.normal(k_s, (B, n_states), jnp.float32)
    action = jax.random.normal(k_a, (B, n_actions), jnp.float32)

    # Fast q-only path (Critic.forward's observable outputs)
    q1, q2 = jax.jit(critic_forward)(packed, history, state, action)
    jax.block_until_ready((q1, q2))

    # Full path (LSTM + attention + scored_x1) for fidelity checking
    fq1, fq2, scored = jax.jit(_critic_pallas_full)(packed, history, state, action)
    jax.block_until_ready((fq1, fq2, scored))

    # Pure-JAX reference (full-precision matmuls).
    with jax.default_matmul_precision("float32"):
        rq1, rq2, rscored = critic_reference(raw, history, state, action)

    assert q1.shape == (B, 1) and q2.shape == (B, 1)
    assert bool(jnp.all(jnp.isfinite(q1))) and bool(jnp.all(jnp.isfinite(q2)))
    assert bool(jnp.allclose(q1, rq1, rtol=1e-2, atol=1e-2)), "q1 mismatch (fast path)"
    assert bool(jnp.allclose(q2, rq2, rtol=1e-2, atol=1e-2)), "q2 mismatch (fast path)"
    assert bool(jnp.allclose(fq1, rq1, rtol=1e-2, atol=1e-2)), "q1 mismatch (full path)"
    assert bool(jnp.allclose(fq2, rq2, rtol=1e-2, atol=1e-2)), "q2 mismatch (full path)"
    assert bool(jnp.allclose(scored, rscored, rtol=1e-2, atol=1e-2)), "scored_x1 mismatch"
    print("KERNEL_OK")
</pallas_src>

<mosaic_0001>
module attributes {stable_mosaic.version = 11 : i64} {
  func.func @critic_q_kernel(%arg0: memref<2x20xf32, #tpu.memory_space<vmem>>, %arg1: memref<20x256xbf16, #tpu.memory_space<vmem>>, %arg2: memref<256x258xbf16, #tpu.memory_space<vmem>>, %arg3: memref<1x514xf32, #tpu.memory_space<vmem>>, %arg4: memref<2x2xf32, #tpu.memory_space<vmem>>) attributes {dimension_semantics = [], scalar_prefetch = 0 : i64, scratch_operands = 0 : i64, tpu.core_type = #tpu.core_type<tc>} {
    %c0 = arith.constant 0 : index
    %c0_0 = arith.constant 0 : index
    %0 = vector.load %arg1[%c0, %c0_0] : memref<20x256xbf16, #tpu.memory_space<vmem>>, vector<20x256xbf16>
    %1 = arith.extf %0 : vector<20x256xbf16> to vector<20x256xf32>
    %c0_1 = arith.constant 0 : index
    %c0_2 = arith.constant 0 : index
    %2 = vector.load %arg2[%c0_1, %c0_2] : memref<256x258xbf16, #tpu.memory_space<vmem>>, vector<256x256xbf16>
    %3 = arith.extf %2 : vector<256x256xbf16> to vector<256x256xf32>
    %c0_3 = arith.constant 0 : index
    %c256 = arith.constant 256 : index
    %4 = vector.load %arg2[%c0_3, %c256] : memref<256x258xbf16, #tpu.memory_space<vmem>>, vector<256x2xbf16>
    %5 = arith.extf %4 : vector<256x2xbf16> to vector<256x2xf32>
    %c0_4 = arith.constant 0 : index
    %c0_5 = arith.constant 0 : index
    %6 = vector.load %arg3[%c0_4, %c0_5] : memref<1x514xf32, #tpu.memory_space<vmem>>, vector<1x256xf32>
    %c0_6 = arith.constant 0 : index
    %c256_7 = arith.constant 256 : index
    %7 = vector.load %arg3[%c0_6, %c256_7] : memref<1x514xf32, #tpu.memory_space<vmem>>, vector<1x256xf32>
    %c0_8 = arith.constant 0 : index
    %c512 = arith.constant 512 : index
    %8 = vector.load %arg3[%c0_8, %c512] : memref<1x514xf32, #tpu.memory_space<vmem>>, vector<1x2xf32>
    %c0_9 = arith.constant 0 : index
    %c0_10 = arith.constant 0 : index
    %9 = vector.load %arg0[%c0_9, %c0_10] : memref<2x20xf32, #tpu.memory_space<vmem>>, vector<2x20xf32>
    %cst = arith.constant dense<0.000000e+00> : vector<2x256xf32>
    %10 = tpu.matmul %9, %1, %cst {dimension_numbers = #tpu.dot_dimension_numbers<[1], [0], [0], [1], [0, 0, 1, 1], [], []>} : vector<2x20xf32>, vector<20x256xf32>, vector<2x256xf32> -> vector<2x256xf32>
    %11 = vector.broadcast %6 : vector<1x256xf32> to vector<2x256xf32>
    %12 = arith.addf %10, %11 : vector<2x256xf32>
    %cst_11 = arith.constant 0.000000e+00 : f32
    %13 = vector.broadcast %cst_11 : f32 to vector<2x256xf32>
    %14 = arith.maximumf %12, %13 : vector<2x256xf32>
    %cst_12 = arith.constant dense<0.000000e+00> : vector<2x256xf32>
    %15 = tpu.matmul %14, %3, %cst_12 {dimension_numbers = #tpu.dot_dimension_numbers<[1], [0], [0], [1], [0, 0, 1, 1], [], []>} : vector<2x256xf32>, vector<256x256xf32>, vector<2x256xf32> -> vector<2x256xf32>
    %16 = vector.broadcast %7 : vector<1x256xf32> to vector<2x256xf32>
    %17 = arith.addf %15, %16 : vector<2x256xf32>
    %cst_13 = arith.constant 0.000000e+00 : f32
    %18 = vector.broadcast %cst_13 : f32 to vector<2x256xf32>
    %19 = arith.maximumf %17, %18 : vector<2x256xf32>
    %cst_14 = arith.constant dense<0.000000e+00> : vector<2x2xf32>
    %20 = tpu.matmul %19, %5, %cst_14 {dimension_numbers = #tpu.dot_dimension_numbers<[1], [0], [0], [1], [0, 0, 1, 1], [], []>} : vector<2x256xf32>, vector<256x2xf32>, vector<2x2xf32> -> vector<2x2xf32>
    %21 = vector.broadcast %8 : vector<1x2xf32> to vector<2x2xf32>
    %22 = arith.addf %20, %21 : vector<2x2xf32>
    %23 = math.tanh %22 : vector<2x2xf32>
    %c0_15 = arith.constant 0 : index
    %c0_16 = arith.constant 0 : index
    %24 = vector.load %arg4[%c0_15, %c0_16] : memref<2x2xf32, #tpu.memory_space<vmem>>, vector<2x2xf32>
    tpu.vector_store %arg4[%c0_15, %c0_16], %23 {strides = array<i32>} : memref<2x2xf32, #tpu.memory_space<vmem>>, vector<2x2xf32>,
    return
  }
}

</mosaic_0001>

<llo_original>
// kernel: critic_forward.1
$region0: #{critic_forward.1}
  #allocation0 [shape = 'u32[]', space=smem, size = 0x4, offset = 0x4, fixed_abs, tag = 'smem constant byte address 0x4 - core index']
  #allocation1 [shape = 'u32[144,128]{1,0:T(1,128)}', space=vmem, size = 0x12000, scoped, tag = 'internal scratch']
  %s0 = inlined_call_operand.vmem [shape: f32[2,20], index: 0, kind: input, shape index: {}]
  %s1 = inlined_call_operand.vmem [shape: bf16[20,256], index: 1, kind: input, shape index: {}]
  %s2 = inlined_call_operand.vmem [shape: bf16[256,258], index: 2, kind: input, shape index: {}]
  %s3 = inlined_call_operand.vmem [shape: f32[1,514], index: 3, kind: input, shape index: {}]
  %s4 = inlined_call_operand.vmem [shape: f32[2,2], index: 4, kind: output, shape index: {}]
  %s5 = sld [smem:[#allocation0]]
  $region26: #{critic_forward.1} parent=0
    _
  %s7 = ssub.s32 1, %s5
  %s8 = scalar_select 0, %s7, %s5
  // Predicated region
  $region2: #{critic_forward.1} parent=0 // pred_check
    _
  $region3: #{critic_forward.1} parent=0 // pred_check_branch
    %10 = sbr.rel (0) target = $region5
  $region4: #{critic_forward.1} parent=0 // pred_region
    _
  $region5: #{critic_forward.1} parent=0 // pred_fallthru
    _
  // Predicated region
  $region6: #{critic_forward.1} parent=0 // pred_check
    _
  $region7: #{critic_forward.1} parent=0 // pred_check_branch
    %12 = sbr.rel (0) target = $region9
  $region8: #{critic_forward.1} parent=0 // pred_region
    _
  $region9: #{critic_forward.1} parent=0 // pred_fallthru
    _
  // Predicated region
  $region10: #{critic_forward.1} parent=0 // pred_check
    _
  $region11: #{critic_forward.1} parent=0 // pred_check_branch
    %14 = sbr.rel (0) target = $region13
  $region12: #{critic_forward.1} parent=0 // pred_region
    _
  $region13: #{critic_forward.1} parent=0 // pred_fallthru
    _
  // Predicated region
  $region14: #{critic_forward.1} parent=0 // pred_check
    _
  $region15: #{critic_forward.1} parent=0 // pred_check_branch
    %16 = sbr.rel (0) target = $region17
  $region16: #{critic_forward.1} parent=0 // pred_region
    _
  $region17: #{critic_forward.1} parent=0 // pred_fallthru
    _
  %v17 = vld [vmem:[%s1] sm:$0xff]
  %v18 = vld [vmem:[%s1 + $0x8] sm:$0xff]
  %v19 = vld [vmem:[%s1 + $0x10] sm:$0x33]
  %v20 = vunpack.c.l.bf16 %v17
  %v21 = vunpack.c.h.bf16 %v17
  %v22 = vunpack.c.l.bf16 %v18
  %v23 = vunpack.c.h.bf16 %v18
  %v24 = vunpack.c.l.bf16 %v19
  %v25 = vunpack.c.h.bf16 %v19
  %v26 = vld [vmem:[%s2] sm:$0xff]
  %v27 = vld [vmem:[%s2 + $0xc] sm:$0xff]
  %v28 = vld [vmem:[%s2 + $0x18] sm:$0xff]
  %v29 = vld [vmem:[%s2 + $0x24] sm:$0xff]
  %v30 = vld [vmem:[%s2 + $0x30] sm:$0xff]
  %v31 = vld [vmem:[%s2 + $0x3c] sm:$0xff]
  %v32 = vld [vmem:[%s2 + $0x48] sm:$0xff]
  %v33 = vld [vmem:[%s2 + $0x54] sm:$0xff]
  %v34 = vld [vmem:[%s2 + $0x60] sm:$0xff]
  %v35 = vld [vmem:[%s2 + $0x6c] sm:$0xff]
  %v36 = vld [vmem:[%s2 + $0x78] sm:$0xff]
  %v37 = vld [vmem:[%s2 + $0x84] sm:$0xff]
  %v38 = vld [vmem:[%s2 + $0x90] sm:$0xff]
  %v39 = vld [vmem:[%s2 + $0x9c] sm:$0xff]
  %v40 = vld [vmem:[%s2 + $0xa8] sm:$0xff]
  %v41 = vld [vmem:[%s2 + $0xb4] sm:$0xff]
  %v42 = vld [vmem:[%s2 + $0xc0] sm:$0xff]
  %v43 = vld [vmem:[%s2 + $0xcc] sm:$0xff]
  %v44 = vld [vmem:[%s2 + $0xd8] sm:$0xff]
  %v45 = vld [vmem:[%s2 + $0xe4] sm:$0xff]
  %v46 = vld [vmem:[%s2 + $0xf0] sm:$0xff]
  %v47 = vld [vmem:[%s2 + $0xfc] sm:$0xff]
  %v48 = vld [vmem:[%s2 + $0x108] sm:$0xff]
  %v49 = vld [vmem:[%s2 + $0x114] sm:$0xff]
  %v50 = vld [vmem:[%s2 + $0x120] sm:$0xff]
  %v51 = vld [vmem:[%s2 + $0x12c] sm:$0xff]
  %v52 = vld [vmem:[%s2 + $0x138] sm:$0xff]
  %v53 = vld [vmem:[%s2 + $0x144] sm:$0xff]
  %v54 = vld [vmem:[%s2 + $0x150] sm:$0xff]
  %v55 = vld [vmem:[%s2 + $0x15c] sm:$0xff]
  %v56 = vld [vmem:[%s2 + $0x168] sm:$0xff]
  %v57 = vld [vmem:[%s2 + $0x174] sm:$0xff]
  %v58 = vunpack.c.l.bf16 %v26
  %v59 = vunpack.c.h.bf16 %v26
  %v60 = vunpack.c.l.bf16 %v27
  %v61 = vunpack.c.h.bf16 %v27
  %v62 = vunpack.c.l.bf16 %v28
  %v63 = vunpack.c.h.bf16 %v28
  %v64 = vunpack.c.l.bf16 %v29
  %v65 = vunpack.c.h.bf16 %v29
  %v66 = vunpack.c.l.bf16 %v30
  %v67 = vunpack.c.h.bf16 %v30
  %v68 = vunpack.c.l.bf16 %v31
  %v69 = vunpack.c.h.bf16 %v31
  %v70 = vunpack.c.l.bf16 %v32
  %v71 = vunpack.c.h.bf16 %v32
  %v72 = vunpack.c.l.bf16 %v33
  %v73 = vunpack.c.h.bf16 %v33
  %v74 = vunpack.c.l.bf16 %v34
  %v75 = vunpack.c.h.bf16 %v34
  %v76 = vunpack.c.l.bf16 %v35
  %v77 = vunpack.c.h.bf16 %v35
  %v78 = vunpack.c.l.bf16 %v36
  %v79 = vunpack.c.h.bf16 %v36
  %v80 = vunpack.c.l.bf16 %v37
  %v81 = vunpack.c.h.bf16 %v37
  %v82 = vunpack.c.l.bf16 %v38
  %v83 = vunpack.c.h.bf16 %v38
  %v84 = vunpack.c.l.bf16 %v39
  %v85 = vunpack.c.h.bf16 %v39
  %v86 = vunpack.c.l.bf16 %v40
  %v87 = vunpack.c.h.bf16 %v40
  %v88 = vunpack.c.l.bf16 %v41
  %v89 = vunpack.c.h.bf16 %v41
  %v90 = vunpack.c.l.bf16 %v42
  %v91 = vunpack.c.h.bf16 %v42
  %v92 = vunpack.c.l.bf16 %v43
  %v93 = vunpack.c.h.bf16 %v43
  %v94 = vunpack.c.l.bf16 %v44
  %v95 = vunpack.c.h.bf16 %v44
  %v96 = vunpack.c.l.bf16 %v45
  %v97 = vunpack.c.h.bf16 %v45
  %v98 = vunpack.c.l.bf16 %v46
  %v99 = vunpack.c.h.bf16 %v46
  %v100 = vunpack.c.l.bf16 %v47
  %v101 = vunpack.c.h.bf16 %v47
  %v102 = vunpack.c.l.bf16 %v48
  %v103 = vunpack.c.h.bf16 %v48
  %v104 = vunpack.c.l.bf16 %v49
  %v105 = vunpack.c.h.bf16 %v49
  %v106 = vunpack.c.l.bf16 %v50
  %v107 = vunpack.c.h.bf16 %v50
  %v108 = vunpack.c.l.bf16 %v51
  %v109 = vunpack.c.h.bf16 %v51
  %v110 = vunpack.c.l.bf16 %v52
  %v111 = vunpack.c.h.bf16 %v52
  %v112 = vunpack.c.l.bf16 %v53
  %v113 = vunpack.c.h.bf16 %v53
  %v114 = vunpack.c.l.bf16 %v54
  %v115 = vunpack.c.h.bf16 %v54
  %v116 = vunpack.c.l.bf16 %v55
  %v117 = vunpack.c.h.bf16 %v55
  %v118 = vunpack.c.l.bf16 %v56
  %v119 = vunpack.c.h.bf16 %v56
  %v120 = vunpack.c.l.bf16 %v57
  %v121 = vunpack.c.h.bf16 %v57
  %v122 = vld [vmem:[%s2 + $0x8] sm:$0xf]
  %v123 = vld [vmem:[%s2 + $0x14] sm:$0xf]
  %v124 = vld [vmem:[%s2 + $0x20] sm:$0xf]
  %v125 = vld [vmem:[%s2 + $0x2c] sm:$0xf]
  %v126 = vld [vmem:[%s2 + $0x38] sm:$0xf]
  %v127 = vld [vmem:[%s2 + $0x44] sm:$0xf]
  %v128 = vld [vmem:[%s2 + $0x50] sm:$0xf]
  %v129 = vld [vmem:[%s2 + $0x5c] sm:$0xf]
  %v130 = vld [vmem:[%s2 + $0x68] sm:$0xf]
  %v131 = vld [vmem:[%s2 + $0x74] sm:$0xf]
  %v132 = vld [vmem:[%s2 + $0x80] sm:$0xf]
  %v133 = vld [vmem:[%s2 + $0x8c] sm:$0xf]
  %v134 = vld [vmem:[%s2 + $0x98] sm:$0xf]
  %v135 = vld [vmem:[%s2 + $0xa4] sm:$0xf]
  %v136 = vld [vmem:[%s2 + $0xb0] sm:$0xf]
  %v137 = vld [vmem:[%s2 + $0xbc] sm:$0xf]
  %v138 = vld [vmem:[%s2 + $0xc8] sm:$0xf]
  %v139 = vld [vmem:[%s2 + $0xd4] sm:$0xf]
  %v140 = vld [vmem:[%s2 + $0xe0] sm:$0xf]
  %v141 = vld [vmem:[%s2 + $0xec] sm:$0xf]
  %v142 = vld [vmem:[%s2 + $0xf8] sm:$0xf]
  %v143 = vld [vmem:[%s2 + $0x104] sm:$0xf]
  %v144 = vld [vmem:[%s2 + $0x110] sm:$0xf]
  %v145 = vld [vmem:[%s2 + $0x11c] sm:$0xf]
  %v146 = vld [vmem:[%s2 + $0x128] sm:$0xf]
  %v147 = vld [vmem:[%s2 + $0x134] sm:$0xf]
  %v148 = vld [vmem:[%s2 + $0x140] sm:$0xf]
  %v149 = vld [vmem:[%s2 + $0x14c] sm:$0xf]
  %v150 = vld [vmem:[%s2 + $0x158] sm:$0xf]
  %v151 = vld [vmem:[%s2 + $0x164] sm:$0xf]
  %v152 = vld [vmem:[%s2 + $0x170] sm:$0xf]
  %v153 = vld [vmem:[%s2 + $0x17c] sm:$0xf]
  %v154 = vunpack.c.l.bf16 %v122
  %v155 = vunpack.c.l.bf16 %v123
  %v156 = vunpack.c.l.bf16 %v124
  %v157 = vunpack.c.l.bf16 %v125
  %v158 = vunpack.c.l.bf16 %v126
  %v159 = vunpack.c.l.bf16 %v127
  %v160 = vunpack.c.l.bf16 %v128
  %v161 = vunpack.c.l.bf16 %v129
  %v162 = vunpack.c.l.bf16 %v130
  %v163 = vunpack.c.l.bf16 %v131
  %v164 = vunpack.c.l.bf16 %v132
  %v165 = vunpack.c.l.bf16 %v133
  %v166 = vunpack.c.l.bf16 %v134
  %v167 = vunpack.c.l.bf16 %v135
  %v168 = vunpack.c.l.bf16 %v136
  %v169 = vunpack.c.l.bf16 %v137
  %v170 = vunpack.c.l.bf16 %v138
  %v171 = vunpack.c.l.bf16 %v139
  %v172 = vunpack.c.l.bf16 %v140
  %v173 = vunpack.c.l.bf16 %v141
  %v174 = vunpack.c.l.bf16 %v142
  %v175 = vunpack.c.l.bf16 %v143
  %v176 = vunpack.c.l.bf16 %v144
  %v177 = vunpack.c.l.bf16 %v145
  %v178 = vunpack.c.l.bf16 %v146
  %v179 = vunpack.c.l.bf16 %v147
  %v180 = vunpack.c.l.bf16 %v148
  %v181 = vunpack.c.l.bf16 %v149
  %v182 = vunpack.c.l.bf16 %v150
  %v183 = vunpack.c.l.bf16 %v151
  %v184 = vunpack.c.l.bf16 %v152
  %v185 = vunpack.c.l.bf16 %v153
  %v186 = vld [vmem:[%s3] sm:$0x3]
  %v187 = vld [vmem:[%s3 + $0x2] sm:$0x3]
  %v188 = vld [vmem:[%s3 + $0x4] sm:$0x1]
  %v189 = vld [vmem:[%s0] sm:$0x3]
  %v191 = vlaneseq
  %v192 = vshrl.u32 %v191, 7
  %v193 = vsub.s32 0, %v192
  %v194 = vrot.slane %v186, %v193
  %v195 = vlaneseq
  %v196 = vshrl.u32 %v195, 7
  %v197 = vsub.s32 1, %v196
  %v198 = vrot.slane %v186, %v197
  %vm201 = vcmask 162816
  %v203 = vsel %vm201, %v189, 0
  %vm205 = vcmask 1043456
  %v207 = vsel %vm205, %v24, 0
  %v210 = vsel %vm205, %v25, 0
  %212 = vmatprep.subr.mxu0 %v21
  %213 = vmatpush1.msra.mxu0 %v20
  %214 = vmatprep.subr.mxu0 %v23
  %215 = vmatpush1.msra.mxu0 %v22
  %216 = vmatprep.subr.mxu0 %v210
  %217 = vmatpush1.msra.mxu0 %v207
  %218 = vmatprep.subr.mxu0 0.0
  %219 = vmatpush1.msra.mxu0 0.0
  %220 = vmatprep.subr.mxu0 0.0
  %221 = vmatpush1.msra.mxu0 0.0
  %222 = vmatprep.subr.mxu0 0.0
  %223 = vmatpush1.msra.mxu0 0.0
  %224 = vmatprep.subr.mxu0 0.0
  %225 = vmatpush1.msra.mxu0 0.0
  %226 = vmatprep.subr.mxu0 0.0
  %227 = vmatpush1.msra.mxu0 0.0
  %228 = vmatprep.subr.mxu0 0.0
  %229 = vmatpush1.msra.mxu0 0.0
  %230 = vmatprep.subr.mxu0 0.0
  %231 = vmatpush1.msra.mxu0 0.0
  %232 = vmatprep.subr.mxu0 0.0
  %233 = vmatpush1.msra.mxu0 0.0
  %234 = vmatprep.subr.mxu0 0.0
  %235 = vmatpush1.msra.mxu0 0.0
  %236 = vmatprep.subr.mxu0 0.0
  %237 = vmatpush1.msra.mxu0 0.0
  %238 = vmatprep.subr.mxu0 0.0
  %239 = vmatpush1.msra.mxu0 0.0
  %240 = vmatprep.subr.mxu0 0.0
  %241 = vmatpush1.msra.mxu0 0.0
  %242 = vmatprep.subr.mxu0 0.0
  %243 = vmatpush1.msra.mxu0 0.0
  %244 = vmatprep.subr.mxu0 0.0
  %245 = vmatpush1.msra.mxu0 0.0
  %246 = vmatprep.subr.mxu0 0.0
  %247 = vmatpush1.msra.mxu0 0.0
  %248 = vmatprep.subr.mxu0 0.0
  %249 = vmatpush1.msra.mxu0 0.0
  %250 = vmatprep.subr.mxu0 0.0
  %251 = vmatpush1.msra.mxu0 0.0
  %252 = vmatprep.subr.mxu0 0.0
  %253 = vmatpush1.msra.mxu0 0.0
  %254 = vmatprep.subr.mxu0 0.0
  %255 = vmatpush1.msra.mxu0 0.0
  %256 = vmatprep.subr.mxu0 0.0
  %257 = vmatpush1.msra.mxu0 0.0
  %258 = vmatprep.subr.mxu0 0.0
  %259 = vmatpush1.msra.mxu0 0.0
  %260 = vmatprep.subr.mxu0 0.0
  %261 = vmatpush1.msra.mxu0 0.0
  %262 = vmatprep.subr.mxu0 0.0
  %263 = vmatpush1.msra.mxu0 0.0
  %264 = vmatprep.subr.mxu0 0.0
  %265 = vmatpush1.msra.mxu0 0.0
  %266 = vmatprep.subr.mxu0 0.0
  %267 = vmatpush1.msra.mxu0 0.0
  %268 = vmatprep.subr.mxu0 0.0
  %269 = vmatpush1.msra.mxu0 0.0
  %270 = vmatprep.subr.mxu0 0.0
  %271 = vmatpush1.msra.mxu0 0.0
  %272 = vmatprep.subr.mxu0 0.0
  %273 = vmatpush1.msra.mxu0 0.0
  %274 = vmatprep.subr.mxu0 0.0
  %275 = vmatpush1.msra.mxu0 0.0
  %276 = vmatprep.mubr.f32.mxu0 0.0
  %277 = vmatmul.mubr.f32.gmra.mrb[0].mxu0 %v203
  %v278 = vpop.f32.mrb[0].mxu0
  %v279 = vadd.f32 %v194, %v278
  %v280 = vpop.f32.mrb[0].mxu0
  %v281 = vadd.f32 %v198, %v280
  %282 = vdwg.mxu0
  %v283 = vmax.f32 %v279, 0.0
  %v284 = vmax.f32 %v281, 0.0
  %v286 = vlaneseq
  %v287 = vshrl.u32 %v286, 7
  %v288 = vsub.s32 0, %v287
  %v289 = vrot.slane %v187, %v288
  %v290 = vlaneseq
  %v291 = vshrl.u32 %v290, 7
  %v292 = vsub.s32 1, %v291
  %v293 = vrot.slane %v187, %v292
  %296 = vmatprep.subr.mxu0 %v59
  %297 = vmatpush1.msra.mxu0 %v58
  %298 = vmatprep.subr.mxu0 %v61
  %299 = vmatpush1.msra.mxu0 %v60
  %300 = vmatprep.subr.mxu0 %v63
  %301 = vmatpush1.msra.mxu0 %v62
  %302 = vmatprep.subr.mxu0 %v65
  %303 = vmatpush1.msra.mxu0 %v64
  %304 = vmatprep.subr.mxu0 %v67
  %305 = vmatpush1.msra.mxu0 %v66
  %306 = vmatprep.subr.mxu0 %v69
  %307 = vmatpush1.msra.mxu0 %v68
  %308 = vmatprep.subr.mxu0 %v71
  %309 = vmatpush1.msra.mxu0 %v70
  %310 = vmatprep.subr.mxu0 %v73
  %311 = vmatpush1.msra.mxu0 %v72
  %312 = vmatprep.subr.mxu0 %v75
  %313 = vmatpush1.msra.mxu0 %v74
  %314 = vmatprep.subr.mxu0 %v77
  %315 = vmatpush1.msra.mxu0 %v76
  %316 = vmatprep.subr.mxu0 %v79
  %317 = vmatpush1.msra.mxu0 %v78
  %318 = vmatprep.subr.mxu0 %v81
  %319 = vmatpush1.msra.mxu0 %v80
  %320 = vmatprep.subr.mxu0 %v83
  %321 = vmatpush1.msra.mxu0 %v82
  %322 = vmatprep.subr.mxu0 %v85
  %323 = vmatpush1.msra.mxu0 %v84
  %324 = vmatprep.subr.mxu0 %v87
  %325 = vmatpush1.msra.mxu0 %v86
  %326 = vmatprep.subr.mxu0 %v89
  %327 = vmatpush1.msra.mxu0 %v88
  %328 = vmatprep.subr.mxu0 %v91
  %329 = vmatpush1.msra.mxu0 %v90
  %330 = vmatprep.subr.mxu0 %v93
  %331 = vmatpush1.msra.mxu0 %v92
  %332 = vmatprep.subr.mxu0 %v95
  %333 = vmatpush1.msra.mxu0 %v94
  %334 = vmatprep.subr.mxu0 %v97
  %335 = vmatpush1.msra.mxu0 %v96
  %336 = vmatprep.subr.mxu0 %v99
  %337 = vmatpush1.msra.mxu0 %v98
  %338 = vmatprep.subr.mxu0 %v101
  %339 = vmatpush1.msra.mxu0 %v100
  %340 = vmatprep.subr.mxu0 %v103
  %341 = vmatpush1.msra.mxu0 %v102
  %342 = vmatprep.subr.mxu0 %v105
  %343 = vmatpush1.msra.mxu0 %v104
  %344 = vmatprep.subr.mxu0 %v107
  %345 = vmatpush1.msra.mxu0 %v106
  %346 = vmatprep.subr.mxu0 %v109
  %347 = vmatpush1.msra.mxu0 %v108
  %348 = vmatprep.subr.mxu0 %v111
  %349 = vmatpush1.msra.mxu0 %v110
  %350 = vmatprep.subr.mxu0 %v113
  %351 = vmatpush1.msra.mxu0 %v112
  %352 = vmatprep.subr.mxu0 %v115
  %353 = vmatpush1.msra.mxu0 %v114
  %354 = vmatprep.subr.mxu0 %v117
  %355 = vmatpush1.msra.mxu0 %v116
  %356 = vmatprep.subr.mxu0 %v119
  %357 = vmatpush1.msra.mxu0 %v118
  %358 = vmatprep.subr.mxu0 %v121
  %359 = vmatpush1.msra.mxu0 %v120
  %360 = vmatprep.mubr.f32.mxu0 %v284
  %361 = vmatmul.mubr.f32.gmra.mrb[0].mxu0 %v283
  %v362 = vpop.f32.mrb[0].mxu0
  %v363 = vadd.f32 %v289, %v362
  %v364 = vpop.f32.mrb[0].mxu0
  %v365 = vadd.f32 %v293, %v364
  %366 = vdwg.mxu0
  %v367 = vmax.f32 %v363, 0.0
  %v368 = vmax.f32 %v365, 0.0
  %v370 = vlaneseq
  %v371 = vshrl.u32 %v370, 7
  %v372 = vsub.s32 0, %v371
  %v373 = vrot.slane %v188, %v372
  %375 = vmatprep.subr.mxu0 0.0
  %376 = vmatpush1.msra.mxu0 %v154
  %377 = vmatprep.subr.mxu0 0.0
  %378 = vmatpush1.msra.mxu0 %v155
  %379 = vmatprep.subr.mxu0 0.0
  %380 = vmatpush1.msra.mxu0 %v156
  %381 = vmatprep.subr.mxu0 0.0
  %382 = vmatpush1.msra.mxu0 %v157
  %383 = vmatprep.subr.mxu0 0.0
  %384 = vmatpush1.msra.mxu0 %v158
  %385 = vmatprep.subr.mxu0 0.0
  %386 = vmatpush1.msra.mxu0 %v159
  %387 = vmatprep.subr.mxu0 0.0
  %388 = vmatpush1.msra.mxu0 %v160
  %389 = vmatprep.subr.mxu0 0.0
  %390 = vmatpush1.msra.mxu0 %v161
  %391 = vmatprep.subr.mxu0 0.0
  %392 = vmatpush1.msra.mxu0 %v162
  %393 = vmatprep.subr.mxu0 0.0
  %394 = vmatpush1.msra.mxu0 %v163
  %395 = vmatprep.subr.mxu0 0.0
  %396 = vmatpush1.msra.mxu0 %v164
  %397 = vmatprep.subr.mxu0 0.0
  %398 = vmatpush1.msra.mxu0 %v165
  %399 = vmatprep.subr.mxu0 0.0
  %400 = vmatpush1.msra.mxu0 %v166
  %401 = vmatprep.subr.mxu0 0.0
  %402 = vmatpush1.msra.mxu0 %v167
  %403 = vmatprep.subr.mxu0 0.0
  %404 = vmatpush1.msra.mxu0 %v168
  %405 = vmatprep.subr.mxu0 0.0
  %406 = vmatpush1.msra.mxu0 %v169
  %407 = vmatprep.subr.mxu0 0.0
  %408 = vmatpush1.msra.mxu0 %v170
  %409 = vmatprep.subr.mxu0 0.0
  %410 = vmatpush1.msra.mxu0 %v171
  %411 = vmatprep.subr.mxu0 0.0
  %412 = vmatpush1.msra.mxu0 %v172
  %413 = vmatprep.subr.mxu0 0.0
  %414 = vmatpush1.msra.mxu0 %v173
  %415 = vmatprep.subr.mxu0 0.0
  %416 = vmatpush1.msra.mxu0 %v174
  %417 = vmatprep.subr.mxu0 0.0
  %418 = vmatpush1.msra.mxu0 %v175
  %419 = vmatprep.subr.mxu0 0.0
  %420 = vmatpush1.msra.mxu0 %v176
  %421 = vmatprep.subr.mxu0 0.0
  %422 = vmatpush1.msra.mxu0 %v177
  %423 = vmatprep.subr.mxu0 0.0
  %424 = vmatpush1.msra.mxu0 %v178
  %425 = vmatprep.subr.mxu0 0.0
  %426 = vmatpush1.msra.mxu0 %v179
  %427 = vmatprep.subr.mxu0 0.0
  %428 = vmatpush1.msra.mxu0 %v180
  %429 = vmatprep.subr.mxu0 0.0
  %430 = vmatpush1.msra.mxu0 %v181
  %431 = vmatprep.subr.mxu0 0.0
  %432 = vmatpush1.msra.mxu0 %v182
  %433 = vmatprep.subr.mxu0 0.0
  %434 = vmatpush1.msra.mxu0 %v183
  %435 = vmatprep.subr.mxu0 0.0
  %436 = vmatpush1.msra.mxu0 %v184
  %437 = vmatprep.subr.mxu0 0.0
  %438 = vmatpush1.msra.mxu0 %v185
  %439 = vmatprep.mubr.f32.mxu0 %v368
  %440 = vmatmul.mubr.f32.gmra.mrb[0].mxu0 %v367
  %v441 = vpop.f32.mrb[0].mxu0
  %v442 = vadd.f32 %v373, %v441
  %v443 = vpop.f32.mrb[0].mxu0
  %444 = vdwg.mxu0
  %v445 = vtanh.pop %v442
  %vm446 = vcmask 9216
  %447 = vst.msk [vmem:[%s4] sm:$0x3] %vm446, %v445
  // Predicated region
  $region18: #{critic_forward.1} parent=0 // pred_check
    _
  $region19: #{critic_forward.1} parent=0 // pred_check_branch
    %449 = sbr.rel (0) target = $region21
  $region20: #{critic_forward.1} parent=0 // pred_region
    _
  $region21: #{critic_forward.1} parent=0 // pred_fallthru
    _
  // Predicated region
  $region22: #{critic_forward.1} parent=0 // pred_check
    _
  $region23: #{critic_forward.1} parent=0 // pred_check_branch
    %451 = sbr.rel (0) target = $region25
  $region24: #{critic_forward.1} parent=0 // pred_region
    _
  $region25: #{critic_forward.1} parent=0 // pred_fallthru
    _

</llo_original>
